<compile_context>
chip_gen: v7x
topology: tpu7x:2x2x1
jax: 0.10.0
libtpu: 0.0.40
codegen_flags: <defaults>
</compile_context>

<pallas_src>
import math
import jax
import jax.numpy as jnp
from jax.experimental import pallas as pl
from jax.experimental.pallas import tpu as pltpu

LANES = 128


def make_pe(hidden_dim: int, max_len: int = 50) -> jnp.ndarray:
    """Deterministic sinusoidal positional-encoding table (max_len, hidden_dim)."""
    pos = jnp.arange(0, max_len, dtype=jnp.float32)[:, None]            # (max_len, 1)
    div = jnp.exp(jnp.arange(0, hidden_dim, 2, dtype=jnp.float32)
                  * (-math.log(10000.0) / hidden_dim))                  # (H/2,)
    pe = jnp.zeros((max_len, hidden_dim), dtype=jnp.float32)
    pe = pe.at[:, 0::2].set(jnp.sin(pos * div))
    pe = pe.at[:, 1::2].set(jnp.cos(pos * div))
    return pe


def _posenc_tile_kernel(x_ref, pe_ref, o_ref):
    # x_ref / pe_ref / o_ref are (tile_rows, 128) tiles.  The batch broadcast
    # of pe is handled entirely by the BlockSpec index_map (pe's block index
    # is independent of the batch grid axis).
    o_ref[...] = x_ref[...] + pe_ref[...]


def _posenc_small_kernel(x_ref, pe_ref, o_ref):
    # Single-block fast path: x/o are (B, N, 128), pe is (N, 128).
    o_ref[...] = x_ref[...] + pe_ref[...][None, :, :]


def _pick_row_tile(n_rows: int, lanes: int, itemsize: int, target_bytes: int) -> int:
    """Row tile near target_bytes, aligned to the dtype's sublane packing
    (8 rows for 32-bit, 16 for bf16/fp16, 32 for 8-bit). If n_rows is smaller
    than the target the full dim is used (always a legal block)."""
    packing = max(1, 4 // itemsize)
    align = 8 * packing
    target_rows = max(align, (target_bytes // (lanes * itemsize)) // align * align)
    return min(n_rows, target_rows)


def positional_encoding(x: jnp.ndarray, pe: jnp.ndarray, *,
                        fast_path_bytes: int = 1 << 20,
                        tile_target_bytes: int = 4 << 20) -> jnp.ndarray:
    """x: (B, S, H); pe: (max_len, H). Returns x + pe[:S] broadcast over batch."""
    B, S, H = x.shape
    max_len = pe.shape[0]
    assert S <= max_len, f"sequence length {S} exceeds max_len {max_len}"

    # Match x.dtype so pe DMA bytes aren't doubled for bf16 activations.
    pe_slice = pe[:S].astype(x.dtype)
    itemsize = x.dtype.itemsize

    # Lane-dense view: flatten (S, H), pad up to a multiple of 128 lanes so
    # every store is a full, unmasked 128-lane vst; padding is sliced off.
    total = S * H
    n_rows = pl.cdiv(total, LANES)
    padded = n_rows * LANES
    x_flat = x.reshape(B, total)
    pe_flat = pe_slice.reshape(total)
    if padded != total:
        x_flat = jnp.pad(x_flat, ((0, 0), (0, padded - total)))
        pe_flat = jnp.pad(pe_flat, (0, padded - total))
    x_in = x_flat.reshape(B, n_rows, LANES)
    pe_in = pe_flat.reshape(n_rows, LANES)

    x_bytes = x_in.size * itemsize
    pe_bytes = pe_in.size * itemsize
    cost = pl.CostEstimate(flops=x_in.size, transcendentals=0,
                           bytes_accessed=2 * x_bytes + pe_bytes)

    if x_bytes <= fast_path_bytes:
        # Small-input fast path: one grid step, whole arrays resident in VMEM,
        # no per-step pipeline overhead.
        out = pl.pallas_call(
            _posenc_small_kernel,
            out_shape=jax.ShapeDtypeStruct(x_in.shape, x.dtype),
            grid_spec=pltpu.PrefetchScalarGridSpec(
                num_scalar_prefetch=0,
                grid=(1,),
                in_specs=[pl.BlockSpec((B, n_rows, LANES), lambda i: (0, 0, 0)),
                          pl.BlockSpec((n_rows, LANES), lambda i: (0, 0))],
                out_specs=pl.BlockSpec((B, n_rows, LANES), lambda i: (0, 0, 0)),
            ),
            cost_estimate=cost,
        )(x_in, pe_in)
    else:
        tile = _pick_row_tile(n_rows, LANES, itemsize, tile_target_bytes)
        row_tiles = pl.cdiv(n_rows, tile)

        # Grid = (row_tiles, B): batch is the innermost axis and pe's block
        # index depends only on the row-tile index, so Pallas fetches each pe
        # tile from HBM once per row tile instead of once per batch element.
        # The leading row axis stays "parallel" so v7x megacore shards rows
        # while each TensorCore keeps a contiguous batch-inner loop.
        x_spec = pl.BlockSpec((pl.Squeezed(), tile, LANES), lambda s, b: (b, s, 0))
        pe_spec = pl.BlockSpec((tile, LANES), lambda s, b: (s, 0))
        out_spec = pl.BlockSpec((pl.Squeezed(), tile, LANES), lambda s, b: (b, s, 0))

        out = pl.pallas_call(
            _posenc_tile_kernel,
            out_shape=jax.ShapeDtypeStruct(x_in.shape, x.dtype),
            grid_spec=pltpu.PrefetchScalarGridSpec(
                num_scalar_prefetch=0,
                grid=(row_tiles, B),
                in_specs=[x_spec, pe_spec],
                out_specs=out_spec,
            ),
            compiler_params=pltpu.CompilerParams(
                dimension_semantics=("parallel", "arbitrary"),
                # 6 resident buffers (2x x, 2x pe, 2x out) at ~4 MiB each plus
                # headroom; fits v7x's 64 MiB physical VMEM, trivially fits
                # v5e/v6e's 128 MiB.
                vmem_limit_bytes=48 << 20,
            ),
            cost_estimate=cost,
        )(x_in, pe_in)

    out = out.reshape(B, padded)
    if padded != total:
        out = out[:, :total]
    return out.reshape(B, S, H)


if __name__ == "__main__":
    max_len = 50
    key = jax.random.PRNGKey(0)

    # Shapes implied by the module forward: batch=2, seq=8, hidden=32.
    B, S, H = 2, 8, 32
    x = jax.random.normal(key, (B, S, H), dtype=jnp.float32)
    pe = make_pe(H, max_len)

    out = jax.block_until_ready(positional_encoding(x, pe))
    ref = x + pe[:S][None, :, :]
    assert out.shape == (B, S, H)
    assert jnp.allclose(out, ref, atol=1e-6), "mismatch vs reference (fast path)"

    # Also exercise the tiled + lane-padded path (S*H not a multiple of 128,
    # ragged last row tile) at a small size by disabling the fast path and
    # shrinking the row-tile target.
    B2, S2, H2 = 2, 33, 48
    x2 = jax.random.normal(jax.random.PRNGKey(0), (B2, S2, H2), dtype=jnp.float32)
    pe2 = make_pe(H2, max_len)
    out2 = jax.block_until_ready(
        positional_encoding(x2, pe2, fast_path_bytes=0, tile_target_bytes=4096))
    ref2 = x2 + pe2[:S2][None, :, :]
    assert out2.shape == (B2, S2, H2)
    assert jnp.allclose(out2, ref2, atol=1e-6), "mismatch vs reference (tiled path)"

    print("KERNEL_OK")
</pallas_src>

<mosaic_0001>
module attributes {stable_mosaic.version = 11 : i64} {
  func.func @_posenc_small_kernel(%arg0: i32, %arg1: memref<2x2x128xf32, #tpu.memory_space<vmem>>, %arg2: memref<2x128xf32, #tpu.memory_space<vmem>>, %arg3: memref<2x2x128xf32, #tpu.memory_space<vmem>>) attributes {dimension_semantics = [#tpu.dimension_semantics<arbitrary>], iteration_bounds = array<i64: 1>, scalar_prefetch = 0 : i64, scratch_operands = 0 : i64, tpu.core_type = #tpu.core_type<tc>, window_params = [{pipeline_mode = #tpu.pipeline_mode<synchronous>, transform_indices = @transform_0, window_bounds = array<i64: 2, 2, 128>}, {pipeline_mode = #tpu.pipeline_mode<synchronous>, transform_indices = @transform_1, window_bounds = array<i64: 2, 128>}, {pipeline_mode = #tpu.pipeline_mode<synchronous>, transform_indices = @transform_2, window_bounds = array<i64: 2, 2, 128>}]} {
    %c0 = arith.constant 0 : index
    %c0_0 = arith.constant 0 : index
    %c0_1 = arith.constant 0 : index
    %0 = vector.load %arg1[%c0, %c0_0, %c0_1] : memref<2x2x128xf32, #tpu.memory_space<vmem>>, vector<2x2x128xf32>
    %c0_2 = arith.constant 0 : index
    %c0_3 = arith.constant 0 : index
    %1 = vector.load %arg2[%c0_2, %c0_3] : memref<2x128xf32, #tpu.memory_space<vmem>>, vector<2x128xf32>
    %2 = vector.shape_cast %1 : vector<2x128xf32> to vector<1x2x128xf32>
    %3 = vector.broadcast %2 : vector<1x2x128xf32> to vector<2x2x128xf32>
    %4 = arith.addf %0, %3 : vector<2x2x128xf32>
    %c0_4 = arith.constant 0 : index
    %c0_5 = arith.constant 0 : index
    %c0_6 = arith.constant 0 : index
    %5 = vector.load %arg3[%c0_4, %c0_5, %c0_6] : memref<2x2x128xf32, #tpu.memory_space<vmem>>, vector<2x2x128xf32>
    tpu.vector_store %arg3[%c0_4, %c0_5, %c0_6], %4 {strides = array<i32>} : memref<2x2x128xf32, #tpu.memory_space<vmem>>, vector<2x2x128xf32>,
    return
  }
  func.func @transform_0(%arg0: i32) -> (i32, i32, i32) {
    %c0_i32 = arith.constant 0 : i32
    %c0_i32_0 = arith.constant 0 : i32
    %c0_i32_1 = arith.constant 0 : i32
    %c0_i32_2 = arith.constant 0 : i32
    return %c0_i32, %c0_i32_0, %c0_i32_1 : i32, i32, i32
  }
  func.func @transform_1(%arg0: i32) -> (i32, i32) {
    %c0_i32 = arith.constant 0 : i32
    %c0_i32_0 = arith.constant 0 : i32
    %c0_i32_1 = arith.constant 0 : i32
    return %c0_i32, %c0_i32_0 : i32, i32
  }
  func.func @transform_2(%arg0: i32) -> (i32, i32, i32) {
    %c0_i32 = arith.constant 0 : i32
    %c0_i32_0 = arith.constant 0 : i32
    %c0_i32_1 = arith.constant 0 : i32
    %c0_i32_2 = arith.constant 0 : i32
    return %c0_i32, %c0_i32_0, %c0_i32_1 : i32, i32, i32
  }
}

</mosaic_0001>

<llo_original>
// kernel: tpu_custom_call.1
$region0: #{tpu_custom_call.1}
  #allocation0 [shape = 'u32[]', space=smem, size = 0x4, offset = 0x4, fixed_abs, tag = 'smem constant byte address 0x4 - core index']
  #allocation1 [shape = 'u32[144,128]{1,0:T(1,128)}', space=vmem, size = 0x12000, scoped, tag = 'internal scratch']
  %s0 = inlined_call_operand.hbm [shape: f32[2,2,128], index: 0, kind: input, shape index: {}]
  %s1 = inlined_call_operand.vmem [shape: f32[2,128], index: 1, kind: input, shape index: {}]
  %s2 = inlined_call_operand.hbm [shape: f32[2,2,128], index: 2, kind: output, shape index: {}]
  %s3 = sld [smem:[#allocation0]]
  $region22: #{tpu_custom_call.1} parent=0
    _
  %s5 = ssub.s32 1, %s3
  %s6 = scalar_select 0, %s5, %s3
  $region1: #{tpu_custom_call.1} parent=0
    #allocation2 [shape = 'u8[2048]{0}', space=vmem, size = 0x800, scoped, tag = 'input window, operand 0, single buffered']
    #allocation3 [shape = 's32[1]{0}', space=sflag, size = 0x4, scoped, tag = 'scoped memory for tpu_custom_call.1']
    #allocation4 [shape = 's32[1]{0}', space=sflag, size = 0x4, scoped, tag = 'scoped memory for tpu_custom_call.1']
    #allocation5 [shape = 'u8[2048]{0}', space=vmem, size = 0x800, scoped, tag = 'output window, operand 0, single buffered']
    %7 = vsyncpa [#allocation3], 0
    %8 = vsyncpa [#allocation4], 0
    // Predicated region
    $region2: #{tpu_custom_call.1} parent=1 // pred_check
      _
    $region3: #{tpu_custom_call.1} parent=1 // pred_check_branch
      %10 = sbr.rel (0) target = $region5
    $region4: #{tpu_custom_call.1} parent=1 // pred_region
      %s12 = ssub.s32 64, 64
      %13 = vsyncadd [#allocation3], %s12
      %s14 = sshll.u32 [#allocation2], 4
      %s15 = int_to_ptr.vmem [resolvable:$true] %s14
      %20 = dma.hbm_to_vmem [thread:$0]  %s0, 64, %s15, [#allocation3], 32, 32, 2
    $region5: #{tpu_custom_call.1} parent=1 // pred_fallthru
      _
    // Predicated region
    $region6: #{tpu_custom_call.1} parent=1 // pred_check
      _
    $region7: #{tpu_custom_call.1} parent=1 // pred_check_branch
      %22 = sbr.rel (0) target = $region9
    $region8: #{tpu_custom_call.1} parent=1 // pred_region
      _
    $region9: #{tpu_custom_call.1} parent=1 // pred_fallthru
      _
    // Predicated region
    $region10: #{tpu_custom_call.1} parent=1 // pred_check
      _
    $region11: #{tpu_custom_call.1} parent=1 // pred_check_branch
      %24 = sbr.rel (0) target = $region13
    $region12: #{tpu_custom_call.1} parent=1 // pred_region
      %25 = dma.done [#allocation3], 64
    $region13: #{tpu_custom_call.1} parent=1 // pred_fallthru
      _
    %v26 = vld [vmem:[#allocation2] sm:$0x3]
    %v27 = vld [vmem:[#allocation2 + $0x2] sm:$0x3]
    %v28 = vld [vmem:[%s1] sm:$0x3]
    %v29 = vadd.f32 %v26, %v28
    %v30 = vadd.f32 %v27, %v28
    %31 = vst [vmem:[#allocation5] sm:$0x3] %v29
    %32 = vst [vmem:[#allocation5 + $0x2] sm:$0x3] %v30
    // Predicated region
    $region14: #{tpu_custom_call.1} parent=1 // pred_check
      _
    $region15: #{tpu_custom_call.1} parent=1 // pred_check_branch
      %34 = sbr.rel (0) target = $region17
    $region16: #{tpu_custom_call.1} parent=1 // pred_region
      %s36 = ssub.s32 64, 64
      %37 = vsyncadd [#allocation4], %s36
      %s38 = sshll.u32 [#allocation5], 4
      %s39 = int_to_ptr.vmem [resolvable:$true] %s38
      %44 = dma.vmem_to_hbm [thread:$0]  %s39, 64, %s2, [#allocation4], 32, 32, 2
    $region17: #{tpu_custom_call.1} parent=1 // pred_fallthru
      _
    // Predicated region
    $region18: #{tpu_custom_call.1} parent=1 // pred_check
      _
    $region19: #{tpu_custom_call.1} parent=1 // pred_check_branch
      %46 = sbr.rel (0) target = $region21
    $region20: #{tpu_custom_call.1} parent=1 // pred_region
      %47 = dma.done [#allocation4], 64
    $region21: #{tpu_custom_call.1} parent=1 // pred_fallthru
      _
    %48 = vsyncpa [#allocation3], 1
    %49 = vsyncpa [#allocation4], 1

</llo_original>
